<compile_context>
chip_gen: v6e
topology: v6e:2x2x1
jax: 0.10.0
libtpu: 0.0.40
codegen_flags: <defaults>
</compile_context>

<pallas_src>
import functools
import math

import jax
import jax.numpy as jnp
from jax.experimental import pallas as pl
from jax.experimental.pallas import tpu as pltpu

EPS = 1e-5                      # torch.nn.LayerNorm default
MATMUL_DTYPE = jnp.float32      # set to jnp.bfloat16 on v6e/v7x for higher MXU
                                # throughput (f32 accumulation kept); re-validate tol.


# ---------------------------------------------------------------------------
# shared math helpers (used by both the kernels and the pure-JAX reference)
# ---------------------------------------------------------------------------
def _relu(x):
    return jnp.maximum(x, 0.0)


def _layernorm(x, g, b):
    # fused mean / mean-of-squares: one pass over the lane axis instead of two
    mu = jnp.mean(x, axis=-1, keepdims=True)
    ms = jnp.mean(x * x, axis=-1, keepdims=True)
    var = jnp.maximum(ms - mu * mu, 0.0)
    return (x - mu) * jax.lax.rsqrt(var + EPS) * g + b


def _round_up(x, m):
    return (x + m - 1) // m * m


def _mm(a, b):
    return jnp.dot(a.astype(MATMUL_DTYPE), b.astype(MATMUL_DTYPE),
                   preferred_element_type=jnp.float32)


def _full_spec(shape):
    n = len(shape)
    return pl.BlockSpec(shape, lambda *args, _n=n: (0,) * _n)


# ---------------------------------------------------------------------------
# Kernel 1: fused Linear -> LayerNorm -> ReLU
# ---------------------------------------------------------------------------
def _proj_kernel(x_ref, w_ref, vec_ref, o_ref):
    v = vec_ref[...]                                   # [3, Fout] = bias, gamma, beta
    h = _mm(x_ref[...], w_ref[...]) + v[0]
    o_ref[...] = _relu(_layernorm(h, v[1], v[2]))


def proj_ln_relu(x, w, b, g, beta):
    M, Fin = x.shape
    Fout = w.shape[1]
    tile = min(256, _round_up(max(M, 8), 8))
    Mp = _round_up(M, tile)
    if Mp != M:
        x = jnp.concatenate([x, jnp.zeros((Mp - M, Fin), x.dtype)], axis=0)
    vec = jnp.stack([b, g, beta], axis=0)
    out = pl.pallas_call(
        _proj_kernel,
        out_shape=jax.ShapeDtypeStruct((Mp, Fout), jnp.float32),
        grid_spec=pltpu.PrefetchScalarGridSpec(
            num_scalar_prefetch=0,
            grid=(Mp // tile,),
            in_specs=[pl.BlockSpec((tile, Fin), lambda i: (i, 0)),
                      _full_spec((Fin, Fout)),
                      _full_spec((3, Fout))],
            out_specs=pl.BlockSpec((tile, Fout), lambda i: (i, 0))),
        compiler_params=pltpu.CompilerParams(dimension_semantics=("parallel",)),
    )(x, w, vec)
    return out[:M]


# ---------------------------------------------------------------------------
# Kernel 2: one fused Spatial_Feature_Layer (grid over blocks of query tokens)
# ---------------------------------------------------------------------------
def _layer_kernel(*refs, n_head, update_edge):
    if update_edge:
        (node_ref, edge_ref, wdd_ref, we_ref, w1_ref, w2_ref,
         vecd_ref, b1_ref, wpe_ref, vecde_ref, nout_ref, eout_ref) = refs
    else:
        (node_ref, edge_ref, wdd_ref, we_ref, w1_ref, w2_ref,
         vecd_ref, b1_ref, nout_ref) = refs

    node = node_ref[...]                      # [N, d]   all tokens
    edge = edge_ref[...]                      # [T, N, de] transposed edge block
    T, N, de = edge.shape
    d = node.shape[-1]
    hd = d // n_head

    wdd = wdd_ref[...]
    w_src, w_tar, w_q, w_k, w_v, w_o = (wdd[i] for i in range(6))
    vd = vecd_ref[...]
    (b_mem, g_mem, be_mem, b_q, b_k, b_v, b_o,
     g_n2, be_n2, b_ff2, g_n3, be_n3) = (vd[i] for i in range(12))

    t0 = pl.multiple_of(pl.program_id(0) * T, T)
    node_blk = node_ref[pl.ds(t0, T), :]      # [T, d] query-token block

    # ---- _build_memory: proj_memory(cat([edge, src_x, tar_x])) without the concat ----
    edge_flat = edge.reshape(T * N, de)
    pre = (_mm(edge_flat, we_ref[...]).reshape(T, N, d)
           + _mm(node_blk, w_src)[:, None, :]            # src_x[i, j] = node[j]
           + _mm(node, w_tar)[None, :, :]                # tar_x[i, j] = node[i]
           + b_mem)
    memory = _relu(_layernorm(pre, g_mem, be_mem))        # [T, N, d]
    mem_flat = memory.reshape(T * N, d)

    # ---- optional edge update: norm_edge(edge + proj_edge(memory)) ----
    if update_edge:
        vde = vecde_ref[...]
        b_pe, g_pe, be_pe, g_ne, be_ne = (vde[i] for i in range(5))
        pe = _relu(_layernorm(_mm(mem_flat, wpe_ref[...]) + b_pe, g_pe, be_pe))
        eout_ref[...] = _layernorm(edge_flat + pe, g_ne, be_ne).reshape(T, N, de)

    # ---- multi-head attention: query = node_blk, keys/values = memory column ----
    scale = 1.0 / math.sqrt(hd)
    q = (_mm(node_blk, w_q) + b_q) * scale                # [T, d]
    k = (_mm(mem_flat, w_k) + b_k).reshape(T, N, d)
    v = (_mm(mem_flat, w_v) + b_v).reshape(T, N, d)
    heads = []
    for h in range(n_head):
        lo, hi = h * hd, (h + 1) * hd
        q_h = q[:, None, lo:hi]                           # [T, 1, hd]
        k_h = k[:, :, lo:hi]                              # [T, N, hd]
        v_h = v[:, :, lo:hi]
        s = jnp.einsum('bqd,bkd->bqk', q_h, k_h,
                       preferred_element_type=jnp.float32)    # [T, 1, N]
        s = s - jnp.max(s, axis=-1, keepdims=True)
        p = jnp.exp(s)
        p = p / jnp.sum(p, axis=-1, keepdims=True)
        o_h = jnp.einsum('bqk,bkd->bqd', p, v_h,
                         preferred_element_type=jnp.float32)  # [T, 1, hd]
        heads.append(o_h[:, 0, :])
    attn = _mm(jnp.concatenate(heads, axis=-1), w_o) + b_o    # out_proj

    # ---- residual + norm2, FFN, residual + norm3 ----
    x1 = _layernorm(node_blk + attn, g_n2, be_n2)
    ff = _relu(_mm(x1, w1_ref[...]) + b1_ref[0])
    ff = _mm(ff, w2_ref[...]) + b_ff2
    nout_ref[...] = _layernorm(x1 + ff, g_n3, be_n3)


def _pick_tile_t(n):
    # prefer >=2 grid steps so v7x's two TensorCores both get work
    for t in (64, 32, 16, 8):
        if n % t == 0 and n // t >= 2:
            return t
    return n


def spatial_layer(node, edge_t, lp, n_head, update_edge):
    N, d = node.shape
    de = edge_t.shape[-1]
    tile_t = _pick_tile_t(N)

    wdd = jnp.stack([lp['w_src'], lp['w_tar'], lp['wq'],
                     lp['wk'], lp['wv'], lp['wo']], axis=0)
    vec_d = jnp.stack([lp['b_mem'], lp['g_mem'], lp['be_mem'],
                       lp['bq'], lp['bk'], lp['bv'], lp['bo'],
                       lp['g_n2'], lp['be_n2'], lp['b2'],
                       lp['g_n3'], lp['be_n3']], axis=0)
    args = [node, edge_t, wdd, lp['we'], lp['w1'], lp['w2'],
            vec_d, lp['b1'][None, :]]
    in_specs = [_full_spec((N, d)),
                pl.BlockSpec((tile_t, N, de), lambda t: (t, 0, 0)),
                _full_spec((6, d, d)),
                _full_spec((de, d)),
                _full_spec((d, 2 * d)),
                _full_spec((2 * d, d)),
                _full_spec((12, d)),
                _full_spec((1, 2 * d))]
    if update_edge:
        vec_de = jnp.stack([lp['b_pe'], lp['g_pe'], lp['be_pe'],
                            lp['g_ne'], lp['be_ne']], axis=0)
        args += [lp['wpe'], vec_de]
        in_specs += [_full_spec((d, de)), _full_spec((5, de))]
        out_shape = (jax.ShapeDtypeStruct((N, d), jnp.float32),
                     jax.ShapeDtypeStruct((N, N, de), jnp.float32))
        out_specs = (pl.BlockSpec((tile_t, d), lambda t: (t, 0)),
                     pl.BlockSpec((tile_t, N, de), lambda t: (t, 0, 0)))
    else:
        out_shape = jax.ShapeDtypeStruct((N, d), jnp.float32)
        out_specs = pl.BlockSpec((tile_t, d), lambda t: (t, 0))

    result = pl.pallas_call(
        functools.partial(_layer_kernel, n_head=n_head, update_edge=update_edge),
        out_shape=out_shape,
        grid_spec=pltpu.PrefetchScalarGridSpec(
            num_scalar_prefetch=0, grid=(N // tile_t,),
            in_specs=in_specs, out_specs=out_specs),
        compiler_params=pltpu.CompilerParams(dimension_semantics=("parallel",)),
    )(*args)

    if update_edge:
        return result[0], result[1]
    return result, edge_t


# ---------------------------------------------------------------------------
# FusionNet forward
# ---------------------------------------------------------------------------
def fusion_net_forward(actors, actor_idcs, lanes, lane_idcs, rpe_list, params, cfg):
    pa, pln, pr = params['proj_actor'], params['proj_lane'], params['proj_rpe']
    actors_p = proj_ln_relu(actors, pa['w'], pa['b'], pa['g'], pa['be'])
    lanes_p = proj_ln_relu(lanes, pln['w'], pln['b'], pln['g'], pln['be'])

    n_layer = cfg['n_scene_layer']
    out_actors, out_lanes = [], []
    for a_idx, l_idx, rpes in zip(actor_idcs, lane_idcs, rpe_list):
        # TODO(synk): rpes['scene_mask'] (key_padding_mask) not supported; None here.
        toks = jnp.concatenate([actors_p[a_idx], lanes_p[l_idx]], axis=0)
        N = toks.shape[0]
        scene = rpes['scene']                              # [d_rpe_in, N, N]
        # transposed-edge convention: edge_t[j, i, :] = proj_rpe_scene(scene[:, i, j])
        rpe_in_t = jnp.transpose(scene, (2, 1, 0)).reshape(N * N, -1)
        edge_t = proj_ln_relu(rpe_in_t, pr['w'], pr['b'], pr['g'], pr['be'])
        edge_t = edge_t.reshape(N, N, -1)
        x = toks
        for i, lp in enumerate(params['layers']):
            upd = cfg['update_edge'] and (i != n_layer - 1)
            x, edge_t = spatial_layer(x, edge_t, lp, cfg['n_scene_head'], upd)
        n_a = a_idx.shape[0]
        out_actors.append(x[:n_a])
        out_lanes.append(x[n_a:])
    return jnp.concatenate(out_actors, axis=0), jnp.concatenate(out_lanes, axis=0)


# ---------------------------------------------------------------------------
# parameters
# ---------------------------------------------------------------------------
def init_params(key, cfg):
    d, de = cfg['d_embed'], cfg['d_rpe']
    n_layer = cfg['n_scene_layer']
    keys = iter(jax.random.split(key, 16 + 32 * n_layer))

    def rnd(shape, scale=0.1):
        return jax.random.normal(next(keys), shape, jnp.float32) * scale

    ones_d, zeros_d = jnp.ones((d,), jnp.float32), jnp.zeros((d,), jnp.float32)
    ones_e, zeros_e = jnp.ones((de,), jnp.float32), jnp.zeros((de,), jnp.float32)

    def proj_p(fin, fout):
        return dict(w=rnd((fin, fout)), b=rnd((fout,)),
                    g=jnp.ones((fout,), jnp.float32),
                    be=jnp.zeros((fout,), jnp.float32))

    layers = []
    for i in range(n_layer):
        upd = cfg['update_edge'] and (i != n_layer - 1)
        lp = dict(
            we=rnd((de, d)), w_src=rnd((d, d)), w_tar=rnd((d, d)),
            b_mem=rnd((d,)), g_mem=ones_d, be_mem=zeros_d,
            wq=rnd((d, d)), wk=rnd((d, d)), wv=rnd((d, d)), wo=rnd((d, d)),
            bq=rnd((d,)), bk=rnd((d,)), bv=rnd((d,)), bo=rnd((d,)),
            g_n2=ones_d, be_n2=zeros_d,
            w1=rnd((d, 2 * d)), b1=rnd((2 * d,)),
            w2=rnd((2 * d, d)), b2=rnd((d,)),
            g_n3=ones_d, be_n3=zeros_d)
        if upd:
            lp.update(wpe=rnd((d, de)), b_pe=rnd((de,)),
                      g_pe=ones_e, be_pe=zeros_e, g_ne=ones_e, be_ne=zeros_e)
        layers.append(lp)

    return dict(proj_actor=proj_p(cfg['d_actor'], d),
                proj_lane=proj_p(cfg['d_lane'], d),
                proj_rpe=proj_p(cfg['d_rpe_in'], de),
                layers=layers)


# ---------------------------------------------------------------------------
# pure-JAX reference (mirrors the PyTorch forward, untransposed edge, real concat)
# ---------------------------------------------------------------------------
def _ref_layer(node, edge, lp, n_head, update_edge):
    P = jax.lax.Precision.HIGHEST
    N, d = node.shape
    hd = d // n_head
    src_x = jnp.broadcast_to(node[None, :, :], (N, N, d))
    tar_x = jnp.broadcast_to(node[:, None, :], (N, N, d))
    w_mem = jnp.concatenate([lp['we'], lp['w_src'], lp['w_tar']], axis=0)
    cat = jnp.concatenate([edge, src_x, tar_x], axis=-1)
    memory = _relu(_layernorm(
        jnp.einsum('ijk,kh->ijh', cat, w_mem, precision=P) + lp['b_mem'],
        lp['g_mem'], lp['be_mem']))
    if update_edge:
        pe = _relu(_layernorm(
            jnp.einsum('ijk,kh->ijh', memory, lp['wpe'], precision=P) + lp['b_pe'],
            lp['g_pe'], lp['be_pe']))
        edge = _layernorm(edge + pe, lp['g_ne'], lp['be_ne'])
    q = (jnp.dot(node, lp['wq'], precision=P) + lp['bq']) / math.sqrt(hd)
    k = jnp.einsum('ijk,kh->ijh', memory, lp['wk'], precision=P) + lp['bk']
    v = jnp.einsum('ijk,kh->ijh', memory, lp['wv'], precision=P) + lp['bv']
    heads = []
    for h in range(n_head):
        lo, hi = h * hd, (h + 1) * hd
        s = jnp.einsum('jd,ijd->ji', q[:, lo:hi], k[:, :, lo:hi], precision=P)
        p = jax.nn.softmax(s, axis=-1)
        heads.append(jnp.einsum('ji,ijd->jd', p, v[:, :, lo:hi], precision=P))
    attn = jnp.dot(jnp.concatenate(heads, axis=-1), lp['wo'], precision=P) + lp['bo']
    x1 = _layernorm(node + attn, lp['g_n2'], lp['be_n2'])
    ff = _relu(jnp.dot(x1, lp['w1'], precision=P) + lp['b1'])
    ff = jnp.dot(ff, lp['w2'], precision=P) + lp['b2']
    return _layernorm(x1 + ff, lp['g_n3'], lp['be_n3']), edge


def reference_forward(actors, actor_idcs, lanes, lane_idcs, rpe_list, params, cfg):
    P = jax.lax.Precision.HIGHEST

    def plr(x, pp):
        return _relu(_layernorm(jnp.dot(x, pp['w'], precision=P) + pp['b'],
                                pp['g'], pp['be']))

    actors_p = plr(actors, params['proj_actor'])
    lanes_p = plr(lanes, params['proj_lane'])
    n_layer = cfg['n_scene_layer']
    oa, ol = [], []
    for a_idx, l_idx, rpes in zip(actor_idcs, lane_idcs, rpe_list):
        toks = jnp.concatenate([actors_p[a_idx], lanes_p[l_idx]], axis=0)
        edge = plr(jnp.transpose(rpes['scene'], (1, 2, 0)), params['proj_rpe'])
        x = toks
        for i, lp in enumerate(params['layers']):
            upd = cfg['update_edge'] and (i != n_layer - 1)
            x, edge = _ref_layer(x, edge, lp, cfg['n_scene_head'], upd)
        n_a = a_idx.shape[0]
        oa.append(x[:n_a])
        ol.append(x[n_a:])
    return jnp.concatenate(oa, axis=0), jnp.concatenate(ol, axis=0)


# ---------------------------------------------------------------------------
if __name__ == "__main__":
    cfg = dict(d_actor=16, d_lane=16, d_rpe_in=5, d_embed=128, d_rpe=128,
               n_scene_head=4, n_scene_layer=2, dropout=0.1, update_edge=True)
    n_scene, n_actor, n_lane = 2, 6, 10
    n_tok = n_actor + n_lane

    key = jax.random.PRNGKey(0)
    k_a, k_l, k_r, k_p = jax.random.split(key, 4)
    actors = jax.random.normal(k_a, (n_scene * n_actor, cfg['d_actor']), jnp.float32)
    lanes = jax.random.normal(k_l, (n_scene * n_lane, cfg['d_lane']), jnp.float32)
    actor_idcs = [jnp.arange(i * n_actor, (i + 1) * n_actor) for i in range(n_scene)]
    lane_idcs = [jnp.arange(i * n_lane, (i + 1) * n_lane) for i in range(n_scene)]
    rpe_list = [dict(scene=jax.random.normal(k, (cfg['d_rpe_in'], n_tok, n_tok),
                                             jnp.float32),
                     scene_mask=None)
                for k in jax.random.split(k_r, n_scene)]
    params = init_params(k_p, cfg)

    actors_out, lanes_out = fusion_net_forward(
        actors, actor_idcs, lanes, lane_idcs, rpe_list, params, cfg)
    actors_out = jax.block_until_ready(actors_out)
    lanes_out = jax.block_until_ready(lanes_out)

    ref_a, ref_l = reference_forward(
        actors, actor_idcs, lanes, lane_idcs, rpe_list, params, cfg)

    assert actors_out.shape == (n_scene * n_actor, cfg['d_embed']), actors_out.shape
    assert lanes_out.shape == (n_scene * n_lane, cfg['d_embed']), lanes_out.shape
    assert bool(jnp.all(jnp.isfinite(actors_out)))
    assert bool(jnp.all(jnp.isfinite(lanes_out)))
    err = max(float(jnp.max(jnp.abs(actors_out - ref_a))),
              float(jnp.max(jnp.abs(lanes_out - ref_l))))
    assert err < 5e-2, err
    print("KERNEL_OK")
</pallas_src>

<mosaic_0001>
module attributes {stable_mosaic.version = 11 : i64} {
  func.func @_proj_kernel(%arg0: i32, %arg1: memref<16x16xf32, #tpu.memory_space<vmem>>, %arg2: memref<16x128xf32, #tpu.memory_space<vmem>>, %arg3: memref<3x128xf32, #tpu.memory_space<vmem>>, %arg4: memref<16x128xf32, #tpu.memory_space<vmem>>) attributes {dimension_semantics = [#tpu.dimension_semantics<parallel>], iteration_bounds = array<i64: 1>, scalar_prefetch = 0 : i64, scratch_operands = 0 : i64, tpu.core_type = #tpu.core_type<tc>, window_params = [{transform_indices = @transform_0, window_bounds = array<i64: 16, 16>}, {pipeline_mode = #tpu.pipeline_mode<synchronous>, transform_indices = @transform_1, window_bounds = array<i64: 16, 128>}, {pipeline_mode = #tpu.pipeline_mode<synchronous>, transform_indices = @transform_2, window_bounds = array<i64: 3, 128>}, {transform_indices = @transform_3, window_bounds = array<i64: 16, 128>}]} {
    %c0 = arith.constant 0 : index
    %c0_0 = arith.constant 0 : index
    %0 = vector.load %arg3[%c0, %c0_0] : memref<3x128xf32, #tpu.memory_space<vmem>>, vector<3x128xf32>
    %c0_1 = arith.constant 0 : index
    %c0_2 = arith.constant 0 : index
    %1 = vector.load %arg1[%c0_1, %c0_2] : memref<16x16xf32, #tpu.memory_space<vmem>>, vector<16x16xf32>
    %c0_3 = arith.constant 0 : index
    %c0_4 = arith.constant 0 : index
    %2 = vector.load %arg2[%c0_3, %c0_4] : memref<16x128xf32, #tpu.memory_space<vmem>>, vector<16x128xf32>
    %cst = arith.constant dense<0.000000e+00> : vector<16x128xf32>
    %3 = tpu.matmul %1, %2, %cst {dimension_numbers = #tpu.dot_dimension_numbers<[1], [0], [0], [1], [0, 0, 1, 1], [], []>} : vector<16x16xf32>, vector<16x128xf32>, vector<16x128xf32> -> vector<16x128xf32>
    %4 = vector.extract_strided_slice %0 {offsets = [0, 0], sizes = [1, 128], strides = [1, 1]} : vector<3x128xf32> to vector<1x128xf32>
    %5 = vector.shape_cast %4 : vector<1x128xf32> to vector<128xf32>
    %6 = vector.shape_cast %5 : vector<128xf32> to vector<1x128xf32>
    %7 = vector.broadcast %6 : vector<1x128xf32> to vector<16x128xf32>
    %8 = arith.addf %3, %7 : vector<16x128xf32>
    %9 = vector.extract_strided_slice %0 {offsets = [1, 0], sizes = [1, 128], strides = [1, 1]} : vector<3x128xf32> to vector<1x128xf32>
    %10 = vector.shape_cast %9 : vector<1x128xf32> to vector<128xf32>
    %11 = vector.extract_strided_slice %0 {offsets = [2, 0], sizes = [1, 128], strides = [1, 1]} : vector<3x128xf32> to vector<1x128xf32>
    %12 = vector.shape_cast %11 : vector<1x128xf32> to vector<128xf32>
    %cst_5 = arith.constant dense<0.000000e+00> : vector<16xf32>
    %13 = vector.multi_reduction <add>, %8, %cst_5 [1] : vector<16x128xf32> to vector<16xf32>
    %14 = vector.shape_cast %13 : vector<16xf32> to vector<16x1xf32>
    %cst_6 = arith.constant 1.280000e+02 : f32
    %15 = vector.broadcast %cst_6 : f32 to vector<16x1xf32>
    %16 = arith.divf %14, %15 : vector<16x1xf32>
    %17 = arith.mulf %8, %8 : vector<16x128xf32>
    %cst_7 = arith.constant dense<0.000000e+00> : vector<16xf32>
    %18 = vector.multi_reduction <add>, %17, %cst_7 [1] : vector<16x128xf32> to vector<16xf32>
    %19 = vector.shape_cast %18 : vector<16xf32> to vector<16x1xf32>
    %cst_8 = arith.constant 1.280000e+02 : f32
    %20 = vector.broadcast %cst_8 : f32 to vector<16x1xf32>
    %21 = arith.divf %19, %20 : vector<16x1xf32>
    %22 = arith.mulf %16, %16 : vector<16x1xf32>
    %23 = arith.subf %21, %22 : vector<16x1xf32>
    %cst_9 = arith.constant 0.000000e+00 : f32
    %24 = vector.broadcast %cst_9 : f32 to vector<16x1xf32>
    %25 = arith.maximumf %23, %24 : vector<16x1xf32>
    %26 = vector.broadcast %16 : vector<16x1xf32> to vector<16x128xf32>
    %27 = arith.subf %8, %26 : vector<16x128xf32>
    %cst_10 = arith.constant 9.99999974E-6 : f32
    %28 = vector.broadcast %cst_10 : f32 to vector<16x1xf32>
    %29 = arith.addf %25, %28 : vector<16x1xf32>
    %30 = math.rsqrt %29 : vector<16x1xf32>
    %31 = vector.broadcast %30 : vector<16x1xf32> to vector<16x128xf32>
    %32 = arith.mulf %27, %31 : vector<16x128xf32>
    %33 = vector.shape_cast %10 : vector<128xf32> to vector<1x128xf32>
    %34 = vector.broadcast %33 : vector<1x128xf32> to vector<16x128xf32>
    %35 = arith.mulf %32, %34 : vector<16x128xf32>
    %36 = vector.shape_cast %12 : vector<128xf32> to vector<1x128xf32>
    %37 = vector.broadcast %36 : vector<1x128xf32> to vector<16x128xf32>
    %38 = arith.addf %35, %37 : vector<16x128xf32>
    %cst_11 = arith.constant 0.000000e+00 : f32
    %39 = vector.broadcast %cst_11 : f32 to vector<16x128xf32>
    %40 = arith.maximumf %38, %39 : vector<16x128xf32>
    %c0_12 = arith.constant 0 : index
    %c0_13 = arith.constant 0 : index
    %41 = vector.load %arg4[%c0_12, %c0_13] : memref<16x128xf32, #tpu.memory_space<vmem>>, vector<16x128xf32>
    tpu.vector_store %arg4[%c0_12, %c0_13], %40 {strides = array<i32>} : memref<16x128xf32, #tpu.memory_space<vmem>>, vector<16x128xf32>,
    return
  }
  func.func @transform_0(%arg0: i32) -> (i32, i32) {
    %c0_i32 = arith.constant 0 : i32
    %c0_i32_0 = arith.constant 0 : i32
    return %arg0, %c0_i32 : i32, i32
  }
  func.func @transform_1(%arg0: i32) -> (i32, i32) {
    %c0_i32 = arith.constant 0 : i32
    %c0_i32_0 = arith.constant 0 : i32
    %c0_i32_1 = arith.constant 0 : i32
    return %c0_i32, %c0_i32_0 : i32, i32
  }
  func.func @transform_2(%arg0: i32) -> (i32, i32) {
    %c0_i32 = arith.constant 0 : i32
    %c0_i32_0 = arith.constant 0 : i32
    %c0_i32_1 = arith.constant 0 : i32
    return %c0_i32, %c0_i32_0 : i32, i32
  }
  func.func @transform_3(%arg0: i32) -> (i32, i32) {
    %c0_i32 = arith.constant 0 : i32
    %c0_i32_0 = arith.constant 0 : i32
    return %arg0, %c0_i32 : i32, i32
  }
}

</mosaic_0001>

<llo_original>
// kernel: tpu_custom_call.1
$region0: #{tpu_custom_call.1}
  #allocation0 [shape = 'u32[]', space=smem, size = 0x4, offset = 0x4, fixed_abs, tag = 'smem constant byte address 0x4 - core index']
  #allocation1 [shape = 'u32[144,128]{1,0:T(1,128)}', space=vmem, size = 0x12000, scoped, tag = 'internal scratch']
  %s0 = inlined_call_operand.hbm [shape: f32[16,16], index: 0, kind: input, shape index: {}]
  %s1 = inlined_call_operand.hbm [shape: f32[16,128], index: 1, kind: input, shape index: {}]
  %s2 = inlined_call_operand.hbm [shape: f32[3,128], index: 2, kind: input, shape index: {}]
  %s3 = inlined_call_operand.hbm [shape: f32[16,128], index: 3, kind: output, shape index: {}]
  %s4 = sld [smem:[#allocation0]]
  $region34: #{tpu_custom_call.1} parent=0
    _
  %s6 = ssub.s32 1, %s4
  %s7 = scalar_select 0, %s6, %s4
  $region1: #{tpu_custom_call.1} parent=0
    #allocation2 [shape = 'u8[8192]{0}', space=vmem, size = 0x2000, scoped, tag = 'input window, operand 0, single buffered']
    #allocation3 [shape = 's32[1]{0}', space=sflag, size = 0x4, scoped, tag = 'scoped memory for tpu_custom_call.1']
    #allocation4 [shape = 's32[1]{0}', space=sflag, size = 0x4, scoped, tag = 'scoped memory for tpu_custom_call.1']
    #allocation5 [shape = 'u8[8192]{0}', space=vmem, size = 0x2000, scoped, tag = 'input window, operand 1, single buffered']
    #allocation6 [shape = 's32[1]{0}', space=sflag, size = 0x4, scoped, tag = 'scoped memory for tpu_custom_call.1']
    #allocation7 [shape = 'u8[2048]{0}', space=vmem, size = 0x800, scoped, tag = 'input window, operand 2, single buffered']
    #allocation8 [shape = 'u8[8192]{0}', space=vmem, size = 0x2000, scoped, tag = 'output window, operand 0, single buffered']
    %8 = vsyncpa [#allocation3], 0
    %9 = vsyncpa [#allocation6], 0
    %10 = vsyncpa [#allocation4], 0
    // Predicated region
    $region2: #{tpu_custom_call.1} parent=1 // pred_check
      _
    $region3: #{tpu_custom_call.1} parent=1 // pred_check_branch
      %12 = sbr.rel (0) target = $region5
    $region4: #{tpu_custom_call.1} parent=1 // pred_region
      %s14 = ssub.s32 256, 256
      %15 = vsyncadd [#allocation3], %s14
      %s16 = sshll.u32 [#allocation2], 4
      %s17 = int_to_ptr.vmem [resolvable:$true] %s16
      %22 = dma.hbm_to_vmem [thread:$0]  %s0, 256, %s17, [#allocation3], 128, 128, 8
    $region5: #{tpu_custom_call.1} parent=1 // pred_fallthru
      _
    // Predicated region
    $region6: #{tpu_custom_call.1} parent=1 // pred_check
      _
    $region7: #{tpu_custom_call.1} parent=1 // pred_check_branch
      %24 = sbr.rel (0) target = $region9
    $region8: #{tpu_custom_call.1} parent=1 // pred_region
      %s26 = ssub.s32 256, 256
      %27 = vsyncadd [#allocation6], %s26
      %s28 = sshll.u32 [#allocation5], 4
      %s29 = int_to_ptr.vmem [resolvable:$true] %s28
      %34 = dma.hbm_to_vmem [thread:$0]  %s1, 256, %s29, [#allocation6], 128, 128, 8
    $region9: #{tpu_custom_call.1} parent=1 // pred_fallthru
      _
    // Predicated region
    $region10: #{tpu_custom_call.1} parent=1 // pred_check
      _
    $region11: #{tpu_custom_call.1} parent=1 // pred_check_branch
      %36 = sbr.rel (0) target = $region13
    $region12: #{tpu_custom_call.1} parent=1 // pred_region
      %s38 = ssub.s32 64, 64
      %39 = vsyncadd [#allocation6], %s38
      %s41 = sshll.u32 [#allocation7], 4
      %s42 = int_to_ptr.vmem [resolvable:$true] %s41
      %44 = dma.hbm_to_vmem [thread:$0]  %s2, 64, %s42, [#allocation6]
    $region13: #{tpu_custom_call.1} parent=1 // pred_fallthru
      _
    // Predicated region
    $region14: #{tpu_custom_call.1} parent=1 // pred_check
      _
    $region15: #{tpu_custom_call.1} parent=1 // pred_check_branch
      %46 = sbr.rel (0) target = $region17
    $region16: #{tpu_custom_call.1} parent=1 // pred_region
      %47 = dma.done [#allocation3], 256
    $region17: #{tpu_custom_call.1} parent=1 // pred_fallthru
      _
    // Predicated region
    $region18: #{tpu_custom_call.1} parent=1 // pred_check
      _
    $region19: #{tpu_custom_call.1} parent=1 // pred_check_branch
      %49 = sbr.rel (0) target = $region21
    $region20: #{tpu_custom_call.1} parent=1 // pred_region
      %50 = dma.done [#allocation6], 256
    $region21: #{tpu_custom_call.1} parent=1 // pred_fallthru
      _
    // Predicated region
    $region22: #{tpu_custom_call.1} parent=1 // pred_check
      _
    $region23: #{tpu_custom_call.1} parent=1 // pred_check_branch
      %52 = sbr.rel (0) target = $region25
    $region24: #{tpu_custom_call.1} parent=1 // pred_region
      %53 = dma.done [#allocation6], 64
    $region25: #{tpu_custom_call.1} parent=1 // pred_fallthru
      _
    %v54 = vld [vmem:[#allocation7] sm:$0x7]
    %v55 = vld [vmem:[#allocation2] sm:$0xff]
    %v56 = vld [vmem:[#allocation2 + $0x8] sm:$0xff]
    %v57 = vld [vmem:[#allocation5] sm:$0xff]
    %v58 = vld [vmem:[#allocation5 + $0x8] sm:$0xff]
    %v59 = vlaneseq
    %v60 = vshrl.u32 %v59, 7
    %v61 = vsub.s32 0, %v60
    %v62 = vrot.slane %v54, %v61
    %vm63 = vcmask 130048
    %v65 = vsel %vm63, %v55, 0
    %v68 = vsel %vm63, %v56, 0
    %70 = vmatprep.subr.mxu0 0.0
    %71 = vmatpush1.msra.mxu0 0.0
    %72 = vmatprep.subr.mxu0 0.0
    %73 = vmatpush1.msra.mxu0 0.0
    %74 = vmatprep.subr.mxu0 0.0
    %75 = vmatpush1.msra.mxu0 0.0
    %76 = vmatprep.subr.mxu0 0.0
    %77 = vmatpush1.msra.mxu0 0.0
    %78 = vmatprep.subr.mxu0 0.0
    %79 = vmatpush1.msra.mxu0 0.0
    %80 = vmatprep.subr.mxu0 0.0
    %81 = vmatpush1.msra.mxu0 0.0
    %82 = vmatprep.subr.mxu0 0.0
    %83 = vmatpush1.msra.mxu0 0.0
    %84 = vmatprep.subr.mxu0 0.0
    %85 = vmatpush1.msra.mxu0 0.0
    %86 = vmatprep.subr.mxu0 0.0
    %87 = vmatpush1.msra.mxu0 0.0
    %88 = vmatprep.subr.mxu0 0.0
    %89 = vmatpush1.msra.mxu0 0.0
    %90 = vmatprep.subr.mxu0 0.0
    %91 = vmatpush1.msra.mxu0 0.0
    %92 = vmatprep.subr.mxu0 0.0
    %93 = vmatpush1.msra.mxu0 0.0
    %94 = vmatprep.subr.mxu0 0.0
    %95 = vmatpush1.msra.mxu0 0.0
    %96 = vmatprep.subr.mxu0 0.0
    %97 = vmatpush1.msra.mxu0 0.0
    %98 = vmatprep.subr.mxu0 0.0
    %99 = vmatpush1.msra.mxu0 %v58
    %100 = vmatprep.subr.mxu0 0.0
    %101 = vmatpush1.msra.mxu0 %v57
    %102 = vmatprep.subr.mxu0 0.0
    %103 = vmatpush2.msra.mxu0 0.0
    %104 = vmatprep.subr.mxu0 0.0
    %105 = vmatpush2.msra.mxu0 0.0
    %106 = vmatprep.subr.mxu0 0.0
    %107 = vmatpush2.msra.mxu0 0.0
    %108 = vmatprep.subr.mxu0 0.0
    %109 = vmatpush2.msra.mxu0 0.0
    %110 = vmatprep.subr.mxu0 0.0
    %111 = vmatpush2.msra.mxu0 0.0
    %112 = vmatprep.subr.mxu0 0.0
    %113 = vmatpush2.msra.mxu0 0.0
    %114 = vmatprep.subr.mxu0 0.0
    %115 = vmatpush2.msra.mxu0 0.0
    %116 = vmatprep.subr.mxu0 0.0
    %117 = vmatpush2.msra.mxu0 0.0
    %118 = vmatprep.subr.mxu0 0.0
    %119 = vmatpush2.msra.mxu0 0.0
    %120 = vmatprep.subr.mxu0 0.0
    %121 = vmatpush2.msra.mxu0 0.0
    %122 = vmatprep.subr.mxu0 0.0
    %123 = vmatpush2.msra.mxu0 0.0
    %124 = vmatprep.subr.mxu0 0.0
    %125 = vmatpush2.msra.mxu0 0.0
    %126 = vmatprep.subr.mxu0 0.0
    %127 = vmatpush2.msra.mxu0 0.0
    %128 = vmatprep.subr.mxu0 0.0
    %129 = vmatpush2.msra.mxu0 0.0
    %130 = vmatprep.subr.mxu0 0.0
    %131 = vmatpush2.msra.mxu0 0.0
    %132 = vmatprep.subr.mxu0 0.0
    %133 = vmatpush2.msra.mxu0 0.0
    %134 = vmatprep.mubr.f32.mxu0 0.0
    %135 = vmatmul.mubr.f32.gmra.mxu0 %v65
    %v136 = vpop.f32.mrf.mxu0
    %v137 = vadd.f32 %v62, %v136
    %v138 = vpop.f32.mrf.mxu0
    %139 = vmatprep.mubr.f32.mxu0 0.0
    %140 = vmatmul.mubr.f32.gmra.mxu0 %v68
    %v141 = vpop.f32.mrf.mxu0
    %v142 = vadd.f32 %v62, %v141
    %v143 = vpop.f32.mrf.mxu0
    %144 = vdwg.mxu0
    %145 = vadd.xlane.f32.xlu0 %v137
    %v146 = vpop.xlane.xlu0 %145
    %147 = vadd.xlane.f32.xlu0 %v142
    %v148 = vpop.xlane.xlu0 %147
    %v149 = vrcp.pop 128.0
    %v150 = vmul.f32 %v146, %v149
    %v151 = vmul.f32 %v148, %v149
    %v152 = vmul.f32 %v137, %v137
    %v153 = vmul.f32 %v142, %v142
    %154 = vadd.xlane.f32.xlu0 %v152
    %v155 = vpop.xlane.xlu0 %154
    %156 = vadd.xlane.f32.xlu0 %v153
    %v157 = vpop.xlane.xlu0 %156
    %v158 = vmul.f32 %v155, %v149
    %v159 = vmul.f32 %v157, %v149
    %v160 = vmul.f32 %v150, %v150
    %v161 = vmul.f32 %v151, %v151
    %v162 = vsub.f32 %v158, %v160
    %v163 = vsub.f32 %v159, %v161
    %v164 = vmax.f32 %v162, 0.0
    %v165 = vmax.f32 %v163, 0.0
    %v166 = vsub.f32 %v137, %v150
    %v167 = vsub.f32 %v142, %v151
    %v168 = vadd.f32 %v164, 1e-05
    %v169 = vadd.f32 %v165, 1e-05
    %v170 = vrsqrt.pop %v168
    %v171 = vrsqrt.pop %v169
    %v172 = vmul.f32 %v166, %v170
    %v173 = vmul.f32 %v167, %v171
    %v174 = vlaneseq
    %v175 = vshrl.u32 %v174, 7
    %v176 = vsub.s32 1, %v175
    %v177 = vrot.slane %v54, %v176
    %v178 = vmul.f32 %v172, %v177
    %v179 = vmul.f32 %v173, %v177
    %v180 = vlaneseq
    %v181 = vshrl.u32 %v180, 7
    %v182 = vsub.s32 2, %v181
    %v183 = vrot.slane %v54, %v182
    %v184 = vadd.f32 %v178, %v183
    %v185 = vadd.f32 %v179, %v183
    %v186 = vmax.f32 %v184, 0.0
    %v187 = vmax.f32 %v185, 0.0
    %188 = vst [vmem:[#allocation8] sm:$0xff] %v186
    %189 = vst [vmem:[#allocation8 + $0x8] sm:$0xff] %v187
    // Predicated region
    $region26: #{tpu_custom_call.1} parent=1 // pred_check
      _
    $region27: #{tpu_custom_call.1} parent=1 // pred_check_branch
      %191 = sbr.rel (0) target = $region29
    $region28: #{tpu_custom_call.1} parent=1 // pred_region
      %s193 = ssub.s32 256, 256
      %194 = vsyncadd [#allocation4], %s193
      %s195 = sshll.u32 [#allocation8], 4
      %s196 = int_to_ptr.vmem [resolvable:$true] %s195
      %201 = dma.vmem_to_hbm [thread:$0]  %s196, 256, %s3, [#allocation4], 128, 128, 8
    $region29: #{tpu_custom_call.1} parent=1 // pred_fallthru
      _
    // Predicated region
    $region30: #{tpu_custom_call.1} parent=1 // pred_check
      _
    $region31: #{tpu_custom_call.1} parent=1 // pred_check_branch
      %203 = sbr.rel (0) target = $region33
    $region32: #{tpu_custom_call.1} parent=1 // pred_region
      %204 = dma.done [#allocation4], 256
    $region33: #{tpu_custom_call.1} parent=1 // pred_fallthru
      _
    %205 = vsyncpa [#allocation3], 1
    %206 = vsyncpa [#allocation6], 1
    %207 = vsyncpa [#allocation4], 1

</llo_original>
